<compile_context>
chip_gen: v7x
topology: tpu7x:2x2x1
jax: 0.10.0
libtpu: 0.0.40
codegen_flags: <defaults>
</compile_context>

<pallas_src>
import math

import jax
import jax.numpy as jnp
from jax.experimental import pallas as pl
from jax.experimental.pallas import tpu as pltpu


# ----------------------------------------------------------------------------
# Kernels
# ----------------------------------------------------------------------------
def _copy_kernel(x_ref, o_ref):
    # Identity copy of one lane-dense (tb, tn) tile through VMEM.
    o_ref[...] = x_ref[...]


def _dma_copy_kernel(x_hbm, o_hbm, sem):
    # Zero-grid HBM -> HBM copy: one DMA, no VMEM round-trip.
    cp = pltpu.make_async_copy(x_hbm, o_hbm, sem)
    cp.start()
    cp.wait()


# ----------------------------------------------------------------------------
# Tiling helpers
# ----------------------------------------------------------------------------
def _default_tile_bytes() -> int:
    """Generation-aware block budget (double-buffered footprint = 4x this)."""
    try:
        kind = jax.devices()[0].device_kind.lower()
    except Exception:  # pragma: no cover - defensive for odd backends
        kind = ""
    if "v5 lite" in kind or "v5lite" in kind or "v5e" in kind:
        return 2 << 20   # 8 MiB pipelined, well under v5e's 16 MiB scoped default
    return 4 << 20       # 16 MiB pipelined, under the 32 MiB default on v6e/v7x


def _pick_block(b: int, n: int, itemsize: int, tile_bytes: int):
    """Fixed lane-dense block shape; the grid uses cdiv and Pallas masks edges.

    Column tile (tn) is the primary lever: multiple of 128, >= 512 when the
    width allows (wide unmasked vst writeback, long contiguous DMA runs).
    Row tile (tb) then fills the remaining budget in sublane-unit multiples.
    """
    sub = {2: 16, 1: 32}.get(itemsize, 8)   # sublane packing unit per dtype width
    lane = 128

    if n <= lane:
        tn = n                               # full extent: always a legal block dim
    else:
        n_pad = pl.cdiv(n, lane) * lane
        budget_cols = (tile_bytes // (itemsize * sub)) // lane * lane
        # >=512 when n allows (soft budget: a 512-wide, `sub`-row block is tiny).
        tn = min(n_pad, max(budget_cols, min(512, n_pad), lane))

    if b <= sub:
        tb = b                               # full extent: always a legal block dim
    else:
        b_pad = pl.cdiv(b, sub) * sub
        budget_rows = (tile_bytes // (itemsize * tn)) // sub * sub
        tb = min(b_pad, max(budget_rows, sub))

    return tb, tn


# ----------------------------------------------------------------------------
# Public wrapper: torch `batch.view(batch.size(0), *shape)` equivalent
# ----------------------------------------------------------------------------
def pallas_reshape(batch: jax.Array, shape: tuple[int, ...],
                   *, mode: str = "view",
                   tile_bytes: int | None = None) -> jax.Array:
    """mode: "view" (metadata only, default) | "tiled" (VMEM copy) | "dma"."""
    b = batch.shape[0]
    n_in = math.prod(batch.shape[1:])
    n_out = math.prod(shape)
    assert n_in == n_out, f"cannot view {batch.shape} as ({b}, *{shape})"

    if mode == "view":
        # Batch-preserving row-major view: metadata-only, no kernel.
        return batch.reshape(b, *shape)

    flat = batch.reshape(b, n_in)
    itemsize = flat.dtype.itemsize
    cost = pl.CostEstimate(flops=0, transcendentals=0,
                           bytes_accessed=2 * b * n_in * itemsize)

    if mode == "dma":
        # Zero-grid HBM->HBM copy: no tiling, no VMEM, runs at DMA roofline.
        out_flat = pl.pallas_call(
            _dma_copy_kernel,
            out_shape=jax.ShapeDtypeStruct((b, n_in), flat.dtype),
            in_specs=[pl.BlockSpec(memory_space=pl.ANY)],
            out_specs=pl.BlockSpec(memory_space=pl.ANY),
            scratch_shapes=[pltpu.SemaphoreType.DMA],
            cost_estimate=cost,
        )(flat)
        return out_flat.reshape(b, *shape)

    assert mode == "tiled", f"unknown mode {mode!r}"
    if tile_bytes is None:
        tile_bytes = _default_tile_bytes()

    tb, tn = _pick_block(b, n_in, itemsize, tile_bytes)
    gb = pl.cdiv(b, tb)       # Pallas masks partial edge blocks
    gn = pl.cdiv(n_in, tn)

    # Put the axis with more blocks first so megacore sharding (v7x) always
    # has extent > 1 to split when the grid is non-trivial.
    if gn >= gb:
        grid = (gn, gb)

        def index_map(j, i):
            return (i, j)
    else:
        grid = (gb, gn)

        def index_map(i, j):
            return (i, j)

    out_flat = pl.pallas_call(
        _copy_kernel,
        out_shape=jax.ShapeDtypeStruct((b, n_in), flat.dtype),
        grid=grid,
        in_specs=[pl.BlockSpec((tb, tn), index_map)],
        out_specs=pl.BlockSpec((tb, tn), index_map),
        compiler_params=pltpu.CompilerParams(
            dimension_semantics=("parallel", "parallel"),
        ),
        cost_estimate=cost,
    )(flat)

    # Final view to the requested target shape (metadata only).
    return out_flat.reshape(b, *shape)


# ----------------------------------------------------------------------------
# Smoke tests
# ----------------------------------------------------------------------------
if __name__ == "__main__":
    key = jax.random.PRNGKey(0)
    k1, k2, k3 = jax.random.split(key, 3)

    # Autoencoder-style use: flat latent (B, C*H*W) -> (B, C, H, W).
    B, C, H, W = 2, 4, 16, 16
    target_shape = (C, H, W)
    x = jax.random.normal(k1, (B, C * H * W), dtype=jnp.float32)
    ref = x.reshape(B, *target_shape)

    # 1) Default fast path: metadata-only reshape, no kernel launch.
    y = jax.block_until_ready(pallas_reshape(x, target_shape))
    assert y.shape == (B, C, H, W) and y.dtype == x.dtype
    assert bool(jnp.array_equal(y, ref))

    # 2) Tiled materializing copy (small input -> single lane-dense block).
    y2 = jax.block_until_ready(pallas_reshape(x, target_shape, mode="tiled"))
    assert y2.shape == (B, C, H, W) and y2.dtype == x.dtype
    assert bool(jnp.array_equal(y2, ref))

    # 3) Zero-grid HBM->HBM DMA copy path.
    y3 = jax.block_until_ready(pallas_reshape(x, target_shape, mode="dma"))
    assert y3.shape == (B, C, H, W) and y3.dtype == x.dtype
    assert bool(jnp.array_equal(y3, ref))

    # 4) Tiled path with a multi-step, double-buffered grid: NCHW
    #    (8, 4, 16, 16) -> (8, 16, 8, 8); a small tile budget forces an
    #    (n-blocks, b-blocks) = (2, 1) grid of lane-dense (8, 512) blocks so
    #    writeback of tile i overlaps the fetch of tile i+1.
    B2 = 8
    x2 = jax.random.normal(k2, (B2, C, H, W), dtype=jnp.float32)
    tgt2 = (16, 8, 8)
    y4 = jax.block_until_ready(
        pallas_reshape(x2, tgt2, mode="tiled", tile_bytes=8 * 1024))
    assert y4.shape == (B2, *tgt2) and y4.dtype == x2.dtype
    assert bool(jnp.array_equal(y4, x2.reshape(B2, *tgt2)))

    # 5) Awkward dims (b=10 not a sublane multiple, n=429 not a lane multiple):
    #    the cdiv grid keeps blocks lane-dense and masks the edges.
    B3, tgt3 = 10, (3, 11, 13)                # n = 429
    x3 = jax.random.normal(k3, (B3, math.prod(tgt3)), dtype=jnp.float32)
    y5 = jax.block_until_ready(
        pallas_reshape(x3, tgt3, mode="tiled", tile_bytes=8 * 1024))
    assert y5.shape == (B3, *tgt3) and y5.dtype == x3.dtype
    assert bool(jnp.array_equal(y5, x3.reshape(B3, *tgt3)))

    print("KERNEL_OK")
</pallas_src>

<mosaic_0001>
module attributes {stable_mosaic.version = 11 : i64} {
  func.func @_copy_kernel(%arg0: i32, %arg1: i32, %arg2: memref<2x1024xf32, #tpu.memory_space<vmem>>, %arg3: memref<2x1024xf32, #tpu.memory_space<vmem>>) attributes {dimension_semantics = [#tpu.dimension_semantics<parallel>, #tpu.dimension_semantics<parallel>], iteration_bounds = array<i64: 1, 1>, scalar_prefetch = 0 : i64, scratch_operands = 0 : i64, tpu.core_type = #tpu.core_type<tc>, window_params = [{transform_indices = @transform_0, window_bounds = array<i64: 2, 1024>}, {transform_indices = @transform_1, window_bounds = array<i64: 2, 1024>}]} {
    %c0 = arith.constant 0 : index
    %c0_0 = arith.constant 0 : index
    %0 = vector.load %arg2[%c0, %c0_0] : memref<2x1024xf32, #tpu.memory_space<vmem>>, vector<2x1024xf32>
    %c0_1 = arith.constant 0 : index
    %c0_2 = arith.constant 0 : index
    %1 = vector.load %arg3[%c0_1, %c0_2] : memref<2x1024xf32, #tpu.memory_space<vmem>>, vector<2x1024xf32>
    tpu.vector_store %arg3[%c0_1, %c0_2], %0 {strides = array<i32>} : memref<2x1024xf32, #tpu.memory_space<vmem>>, vector<2x1024xf32>,
    return
  }
  func.func @transform_0(%arg0: i32, %arg1: i32) -> (i32, i32) {
    %c0_i32 = arith.constant 0 : i32
    return %arg1, %arg0 : i32, i32
  }
  func.func @transform_1(%arg0: i32, %arg1: i32) -> (i32, i32) {
    %c0_i32 = arith.constant 0 : i32
    return %arg1, %arg0 : i32, i32
  }
}

</mosaic_0001>

<llo_original>
// kernel: tpu_custom_call.1
$region0: #{tpu_custom_call.1}
  #allocation0 [shape = 'u32[]', space=smem, size = 0x4, offset = 0x4, fixed_abs, tag = 'smem constant byte address 0x4 - core index']
  #allocation1 [shape = 'u32[144,128]{1,0:T(1,128)}', space=vmem, size = 0x12000, scoped, tag = 'internal scratch']
  %s0 = inlined_call_operand.hbm [shape: f32[2,1024], index: 0, kind: input, shape index: {}]
  %s1 = inlined_call_operand.hbm [shape: f32[2,1024], index: 1, kind: output, shape index: {}]
  %s2 = sld [smem:[#allocation0]]
  $region18: #{tpu_custom_call.1} parent=0
    _
  %s4 = ssub.s32 1, %s2
  %s5 = scalar_select 0, %s4, %s2
  $region1: #{tpu_custom_call.1} parent=0
    #allocation2 [shape = 'u8[8192]{0}', space=vmem, size = 0x2000, scoped, tag = 'input window, operand 0, single buffered']
    #allocation3 [shape = 's32[1]{0}', space=sflag, size = 0x4, scoped, tag = 'scoped memory for tpu_custom_call.1']
    #allocation4 [shape = 's32[1]{0}', space=sflag, size = 0x4, scoped, tag = 'scoped memory for tpu_custom_call.1']
    #allocation5 [shape = 'u8[8192]{0}', space=vmem, size = 0x2000, scoped, tag = 'output window, operand 0, single buffered']
    %6 = vsyncpa [#allocation3], 0
    %7 = vsyncpa [#allocation4], 0
    // Predicated region
    $region2: #{tpu_custom_call.1} parent=1 // pred_check
      _
    $region3: #{tpu_custom_call.1} parent=1 // pred_check_branch
      %9 = sbr.rel (0) target = $region5
    $region4: #{tpu_custom_call.1} parent=1 // pred_region
      %s11 = ssub.s32 256, 256
      %12 = vsyncadd [#allocation3], %s11
      %s14 = sshll.u32 [#allocation2], 4
      %s15 = int_to_ptr.vmem [resolvable:$true] %s14
      %17 = dma.hbm_to_vmem [thread:$0]  %s0, 256, %s15, [#allocation3]
    $region5: #{tpu_custom_call.1} parent=1 // pred_fallthru
      _
    // Predicated region
    $region6: #{tpu_custom_call.1} parent=1 // pred_check
      _
    $region7: #{tpu_custom_call.1} parent=1 // pred_check_branch
      %19 = sbr.rel (0) target = $region9
    $region8: #{tpu_custom_call.1} parent=1 // pred_region
      %20 = dma.done [#allocation3], 256
    $region9: #{tpu_custom_call.1} parent=1 // pred_fallthru
      _
    %v21 = vld [vmem:[#allocation2] sm:$0xff]
    %v22 = vld [vmem:[#allocation2 + $0x8] sm:$0xff]
    %23 = vst [vmem:[#allocation5] sm:$0xff] %v21
    %24 = vst [vmem:[#allocation5 + $0x8] sm:$0xff] %v22
    // Predicated region
    $region10: #{tpu_custom_call.1} parent=1 // pred_check
      _
    $region11: #{tpu_custom_call.1} parent=1 // pred_check_branch
      %26 = sbr.rel (0) target = $region13
    $region12: #{tpu_custom_call.1} parent=1 // pred_region
      %s28 = ssub.s32 256, 256
      %29 = vsyncadd [#allocation4], %s28
      %s31 = sshll.u32 [#allocation5], 4
      %s32 = int_to_ptr.vmem [resolvable:$true] %s31
      %34 = dma.vmem_to_hbm [thread:$0]  %s32, 256, %s1, [#allocation4]
    $region13: #{tpu_custom_call.1} parent=1 // pred_fallthru
      _
    // Predicated region
    $region14: #{tpu_custom_call.1} parent=1 // pred_check
      _
    $region15: #{tpu_custom_call.1} parent=1 // pred_check_branch
      %36 = sbr.rel (0) target = $region17
    $region16: #{tpu_custom_call.1} parent=1 // pred_region
      %37 = dma.done [#allocation4], 256
    $region17: #{tpu_custom_call.1} parent=1 // pred_fallthru
      _
    %38 = vsyncpa [#allocation3], 1
    %39 = vsyncpa [#allocation4], 1

</llo_original>
